<compile_context>
chip_gen: v7x
topology: tpu7x:2x2x1
jax: 0.10.0
libtpu: 0.0.40
codegen_flags: <defaults>
</compile_context>

<pallas_src>
import math
import functools

import jax
import jax.numpy as jnp
import numpy as np
from jax.experimental import pallas as pl
from jax.experimental.pallas import tpu as pltpu


def _round_up(x, m):
    return ((x + m - 1) // m) * m


# ----------------------------------------------------------------------------
# Kernels
# ----------------------------------------------------------------------------
def _cross_attn_split_kernel(x_ref, x1_ref, wq_ref, wk_ref, wv_ref, o_ref, *,
                             norm_fact):
    """Used when dim_k % 128 != 0: separate q/v matmuls, no lane-offset slices."""
    B, tn, d_in = x_ref.shape
    dk = wq_ref.shape[1]

    # Merge (B, tn) -> B*tn rows.  tn is a multiple of the dtype sublane tile,
    # so the reshape is layout-free; inputs feed the MXU in their native dtype
    # with f32 accumulation.
    x2d = x_ref[...].reshape(B * tn, d_in)
    x1_2d = x1_ref[...].reshape(B * tn, d_in)

    q = jnp.dot(x2d, wq_ref[...], preferred_element_type=jnp.float32)
    k = jnp.dot(x1_2d, wk_ref[...], preferred_element_type=jnp.float32)
    v = jnp.dot(x2d, wv_ref[...], preferred_element_type=jnp.float32)

    # relu(q*k*v / sqrt(dk)); on a padded tail step the extra rows hold garbage
    # but their softmax stays within their own (n, dk) column and the writes
    # are dropped by the output DMA, so valid outputs are unaffected.
    dist = jnp.maximum(q * k * v * norm_fact, 0.0).reshape(B, tn, dk)

    # Softmax over axis 0 (batch).  Correct only because the block keeps the
    # FULL batch in every tile (block shape starts with B).
    m = jnp.max(dist, axis=0, keepdims=True)
    e = jnp.exp(dist - m)
    s = jnp.sum(e, axis=0, keepdims=True)
    o_ref[...] = (e * pl.reciprocal(s, approx=True)).astype(o_ref.dtype)


def _cross_attn_fused_kernel(x_ref, x1_ref, wqv_ref, wk_ref, o_ref, *,
                             norm_fact, dim_k):
    """Used when dim_k % 128 == 0: qv slices are lane-tile-aligned (views)."""
    B, tn, d_in = x_ref.shape
    x2d = x_ref[...].reshape(B * tn, d_in)
    x1_2d = x1_ref[...].reshape(B * tn, d_in)

    qv = jnp.dot(x2d, wqv_ref[...], preferred_element_type=jnp.float32)
    k = jnp.dot(x1_2d, wk_ref[...], preferred_element_type=jnp.float32)

    dist = jnp.maximum(qv[:, :dim_k] * k * qv[:, dim_k:] * norm_fact, 0.0)
    dist = dist.reshape(B, tn, dim_k)

    m = jnp.max(dist, axis=0, keepdims=True)
    e = jnp.exp(dist - m)
    s = jnp.sum(e, axis=0, keepdims=True)
    o_ref[...] = (e * pl.reciprocal(s, approx=True)).astype(o_ref.dtype)


# ----------------------------------------------------------------------------
# Tiling heuristics
# ----------------------------------------------------------------------------
def _vmem_capacity_bytes():
    try:
        return int(pltpu.get_tpu_info().vmem_capacity_bytes)
    except Exception:
        return 64 * 1024 * 1024  # conservative default (v7x per-core VMEM)


def _sublane_tile(itemsize):
    # f32 -> 8, bf16 -> 16, int8/fp8 -> 32 rows per packed vreg.
    return max(8, 32 // max(int(itemsize), 1))


def _pick_seq_tile(B, N, D_in, Dk, in_itemsize, out_itemsize, vmem_cap, sub):
    """Largest sequence tile (multiple of the dtype sublane tile) whose padded
    VMEM footprint fits the per-generation budget, while keeping >=2 grid
    steps (v7x megacore) and preferring a tile that divides N."""
    if N <= sub:
        return N

    d_in_p = _round_up(D_in, 128)   # lane-padded input width
    dk_p = _round_up(Dk, 128)       # lane-padded output width

    # Tile budget: ~3/8 of physical VMEM on 64 MiB chips (v7x), ~1/2 on
    # 128 MiB chips (v5e/v6e); weights + compiler scratch take the rest.
    budget = vmem_cap * 3 // 8 if vmem_cap <= (64 << 20) else vmem_cap // 2

    # Per seq-row VMEM with padded footprints:
    #   x + x1 input blocks (double-buffered), output block (double-buffered),
    #   ~5 live f32 intermediates (q, k, v, dist, e) of padded width dk_p.
    per_row = (2 * B * d_in_p * in_itemsize * 2
               + B * dk_p * out_itemsize * 2
               + 5 * B * dk_p * 4)
    tn_cap = max(sub, budget // max(per_row, 1))

    # Keep >=2 grid steps so dimension_semantics=("parallel",) can shard across
    # v7x's two TensorCores; >=8 steps for long sequences so the DMA pipeline
    # reaches steady state and per-step overhead amortizes.
    min_steps = 8 if N >= 4096 else 2
    tn_cap = min(tn_cap, max(sub, _round_up(max(N // min_steps, 1), sub)))
    tn_cap = min(tn_cap, _round_up(N, sub))

    # Prefer a tile that divides N (no padded tail step), if it isn't much
    # smaller than the VMEM-derived cap.
    tn = max(sub, (tn_cap // sub) * sub)
    best_div = 0
    for cand in range(sub, tn_cap + 1, sub):
        if N % cand == 0:
            best_div = cand
    if best_div >= max(sub, tn // 2):
        tn = best_div
    return tn


# ----------------------------------------------------------------------------
# Wrapper
# ----------------------------------------------------------------------------
def cross_attention_score(x, x1, wq_t, wk_t, wv_t, *, dim_k=None, seq_tile=None):
    """x, x1: (B, N, D_in); w*_t: (D_in, D_out) weights, pre-transposed."""
    B, N, D_in = x.shape
    assert x1.shape == (B, N, D_in), "x and x1 must share (B, N, D_in)"
    Dk = wq_t.shape[1]
    Dv = wv_t.shape[1]
    assert wq_t.shape == (D_in, Dk) and wk_t.shape == (D_in, Dk)
    assert wv_t.shape == (D_in, Dv)
    assert Dk == Dv, "elementwise q*k*v requires dim_k == dim_v"
    if dim_k is not None:
        assert dim_k == Dk, "dim_k must match linear_q output features"
    norm_fact = 1.0 / math.sqrt(Dk)

    vmem_cap = _vmem_capacity_bytes()
    sub = _sublane_tile(x.dtype.itemsize)
    if seq_tile is None:
        tn = _pick_seq_tile(B, N, D_in, Dk, x.dtype.itemsize, x.dtype.itemsize,
                            vmem_cap, sub)
    else:
        tn = N if N <= sub else min(_round_up(int(seq_tile), sub), N)

    vmem_limit = int(min(vmem_cap * 3 // 4, 96 * 1024 * 1024))
    grid = (pl.cdiv(N, tn),)

    # Blocks that tile only the sequence axis; every block carries the FULL
    # batch so the softmax over axis 0 is a tile-local reduction.
    x_spec = pl.BlockSpec((B, tn, D_in), lambda i: (0, i, 0))
    x1_spec = pl.BlockSpec((B, tn, D_in), lambda i: (0, i, 0))
    out_spec = pl.BlockSpec((B, tn, Dk), lambda i: (0, i, 0))

    if Dk % 128 == 0:
        # Lane-aligned Dk: fuse [Wq | Wv] into one wide RHS (one matmul for q
        # and v); the qv slices in the kernel sit on 128-lane boundaries.
        wqv_t = jnp.concatenate([wq_t, wv_t], axis=1)  # (D_in, 2*Dk)
        kernel = functools.partial(_cross_attn_fused_kernel,
                                   norm_fact=norm_fact, dim_k=Dk)
        operands = (x, x1, wqv_t, wk_t)
        w_specs = [pl.BlockSpec((D_in, 2 * Dk), lambda i: (0, 0)),
                   pl.BlockSpec((D_in, Dk), lambda i: (0, 0))]
    else:
        # Narrow Dk: two separate matmuls avoid a lane-misaligned slice of the
        # f32 projection result (would force an XLU relayout every step).
        kernel = functools.partial(_cross_attn_split_kernel,
                                   norm_fact=norm_fact)
        operands = (x, x1, wq_t, wk_t, wv_t)
        w_specs = [pl.BlockSpec((D_in, Dk), lambda i: (0, 0)),
                   pl.BlockSpec((D_in, Dk), lambda i: (0, 0)),
                   pl.BlockSpec((D_in, Dv), lambda i: (0, 0))]

    return pl.pallas_call(
        kernel,
        out_shape=jax.ShapeDtypeStruct((B, N, Dk), x.dtype),
        grid_spec=pltpu.PrefetchScalarGridSpec(
            num_scalar_prefetch=0,
            grid=grid,
            in_specs=[x_spec, x1_spec] + w_specs,
            out_specs=out_spec,
        ),
        compiler_params=pltpu.CompilerParams(
            dimension_semantics=("parallel",),
            vmem_limit_bytes=vmem_limit),
    )(*operands)


# ----------------------------------------------------------------------------
# Reference + self-test
# ----------------------------------------------------------------------------
def _reference(x, x1, wq_t, wk_t, wv_t):
    dk = wq_t.shape[1]
    q = x @ wq_t
    k = x1 @ wk_t
    v = x @ wv_t
    dist = q * k * v * (1.0 / math.sqrt(dk))
    dist = jnp.maximum(dist, 0.0)
    return jax.nn.softmax(dist.astype(jnp.float32), axis=0).astype(x.dtype)


if __name__ == "__main__":
    # --- Small shapes consistent with the module's forward (split path). ---
    B, N, D_in = 2, 8, 32
    dim_k = dim_v = 16   # q*k*v elementwise product requires dim_k == dim_v

    key = jax.random.PRNGKey(0)
    kx, kx1, kq, kk, kv = jax.random.split(key, 5)

    x = jax.random.normal(kx, (B, N, D_in), dtype=jnp.float32)
    x1 = jax.random.normal(kx1, (B, N, D_in), dtype=jnp.float32)

    # nn.Linear-like init (uniform +/- 1/sqrt(fan_in)), pre-transposed (D_in, D_out).
    bound = 1.0 / math.sqrt(D_in)
    wq_t = jax.random.uniform(kq, (D_in, dim_k), jnp.float32, -bound, bound)
    wk_t = jax.random.uniform(kk, (D_in, dim_k), jnp.float32, -bound, bound)
    wv_t = jax.random.uniform(kv, (D_in, dim_v), jnp.float32, -bound, bound)

    out = jax.block_until_ready(
        cross_attention_score(x, x1, wq_t, wk_t, wv_t, dim_k=dim_k))
    ref = _reference(x, x1, wq_t, wk_t, wv_t)
    np.testing.assert_allclose(np.asarray(out), np.asarray(ref),
                               rtol=3e-3, atol=3e-3)

    # --- Larger case: exercises the multi-step pipelined grid (split path). ---
    kx2, kx12 = jax.random.split(jax.random.PRNGKey(1), 2)
    x_big = jax.random.normal(kx2, (2, 256, D_in), dtype=jnp.float32)
    x1_big = jax.random.normal(kx12, (2, 256, D_in), dtype=jnp.float32)
    out_big = jax.block_until_ready(
        cross_attention_score(x_big, x1_big, wq_t, wk_t, wv_t, seq_tile=64))
    ref_big = _reference(x_big, x1_big, wq_t, wk_t, wv_t)
    np.testing.assert_allclose(np.asarray(out_big), np.asarray(ref_big),
                               rtol=3e-3, atol=3e-3)

    # --- Lane-aligned dim_k: exercises the fused [Wq|Wv] path + auto tiling. ---
    dim_k2 = 128
    kq2, kk2, kv2, kx3, kx13 = jax.random.split(jax.random.PRNGKey(2), 5)
    wq2 = jax.random.uniform(kq2, (D_in, dim_k2), jnp.float32, -bound, bound)
    wk2 = jax.random.uniform(kk2, (D_in, dim_k2), jnp.float32, -bound, bound)
    wv2 = jax.random.uniform(kv2, (D_in, dim_k2), jnp.float32, -bound, bound)
    x_f = jax.random.normal(kx3, (2, 64, D_in), dtype=jnp.float32)
    x1_f = jax.random.normal(kx13, (2, 64, D_in), dtype=jnp.float32)
    out_f = jax.block_until_ready(
        cross_attention_score(x_f, x1_f, wq2, wk2, wv2, dim_k=dim_k2))
    ref_f = _reference(x_f, x1_f, wq2, wk2, wv2)
    np.testing.assert_allclose(np.asarray(out_f), np.asarray(ref_f),
                               rtol=3e-3, atol=3e-3)

    print("KERNEL_OK")
</pallas_src>

<mosaic_0001>
module attributes {stable_mosaic.version = 11 : i64} {
  func.func @_cross_attn_split_kernel(%arg0: i32, %arg1: memref<2x8x32xf32, #tpu.memory_space<vmem>>, %arg2: memref<2x8x32xf32, #tpu.memory_space<vmem>>, %arg3: memref<32x16xf32, #tpu.memory_space<vmem>>, %arg4: memref<32x16xf32, #tpu.memory_space<vmem>>, %arg5: memref<32x16xf32, #tpu.memory_space<vmem>>, %arg6: memref<2x8x16xf32, #tpu.memory_space<vmem>>) attributes {dimension_semantics = [#tpu.dimension_semantics<parallel>], iteration_bounds = array<i64: 1>, scalar_prefetch = 0 : i64, scratch_operands = 0 : i64, tpu.core_type = #tpu.core_type<tc>, window_params = [{transform_indices = @transform_0, window_bounds = array<i64: 2, 8, 32>}, {transform_indices = @transform_1, window_bounds = array<i64: 2, 8, 32>}, {pipeline_mode = #tpu.pipeline_mode<synchronous>, transform_indices = @transform_2, window_bounds = array<i64: 32, 16>}, {pipeline_mode = #tpu.pipeline_mode<synchronous>, transform_indices = @transform_3, window_bounds = array<i64: 32, 16>}, {pipeline_mode = #tpu.pipeline_mode<synchronous>, transform_indices = @transform_4, window_bounds = array<i64: 32, 16>}, {transform_indices = @transform_5, window_bounds = array<i64: 2, 8, 16>}]} {
    %c0 = arith.constant 0 : index
    %c0_0 = arith.constant 0 : index
    %c0_1 = arith.constant 0 : index
    %0 = vector.load %arg1[%c0, %c0_0, %c0_1] : memref<2x8x32xf32, #tpu.memory_space<vmem>>, vector<2x8x32xf32>
    %1 = vector.shape_cast %0 : vector<2x8x32xf32> to vector<16x32xf32>
    %c0_2 = arith.constant 0 : index
    %c0_3 = arith.constant 0 : index
    %c0_4 = arith.constant 0 : index
    %2 = vector.load %arg2[%c0_2, %c0_3, %c0_4] : memref<2x8x32xf32, #tpu.memory_space<vmem>>, vector<2x8x32xf32>
    %3 = vector.shape_cast %2 : vector<2x8x32xf32> to vector<16x32xf32>
    %c0_5 = arith.constant 0 : index
    %c0_6 = arith.constant 0 : index
    %4 = vector.load %arg3[%c0_5, %c0_6] : memref<32x16xf32, #tpu.memory_space<vmem>>, vector<32x16xf32>
    %cst = arith.constant dense<0.000000e+00> : vector<16x16xf32>
    %5 = tpu.matmul %1, %4, %cst {dimension_numbers = #tpu.dot_dimension_numbers<[1], [0], [0], [1], [0, 0, 1, 1], [], []>} : vector<16x32xf32>, vector<32x16xf32>, vector<16x16xf32> -> vector<16x16xf32>
    %c0_7 = arith.constant 0 : index
    %c0_8 = arith.constant 0 : index
    %6 = vector.load %arg4[%c0_7, %c0_8] : memref<32x16xf32, #tpu.memory_space<vmem>>, vector<32x16xf32>
    %cst_9 = arith.constant dense<0.000000e+00> : vector<16x16xf32>
    %7 = tpu.matmul %3, %6, %cst_9 {dimension_numbers = #tpu.dot_dimension_numbers<[1], [0], [0], [1], [0, 0, 1, 1], [], []>} : vector<16x32xf32>, vector<32x16xf32>, vector<16x16xf32> -> vector<16x16xf32>
    %c0_10 = arith.constant 0 : index
    %c0_11 = arith.constant 0 : index
    %8 = vector.load %arg5[%c0_10, %c0_11] : memref<32x16xf32, #tpu.memory_space<vmem>>, vector<32x16xf32>
    %cst_12 = arith.constant dense<0.000000e+00> : vector<16x16xf32>
    %9 = tpu.matmul %1, %8, %cst_12 {dimension_numbers = #tpu.dot_dimension_numbers<[1], [0], [0], [1], [0, 0, 1, 1], [], []>} : vector<16x32xf32>, vector<32x16xf32>, vector<16x16xf32> -> vector<16x16xf32>
    %10 = arith.mulf %5, %7 : vector<16x16xf32>
    %11 = arith.mulf %10, %9 : vector<16x16xf32>
    %cst_13 = arith.constant 2.500000e-01 : f32
    %12 = vector.broadcast %cst_13 : f32 to vector<16x16xf32>
    %13 = arith.mulf %11, %12 : vector<16x16xf32>
    %cst_14 = arith.constant 0.000000e+00 : f32
    %14 = vector.broadcast %cst_14 : f32 to vector<16x16xf32>
    %15 = arith.maximumf %13, %14 : vector<16x16xf32>
    %16 = vector.shape_cast %15 : vector<16x16xf32> to vector<2x8x16xf32>
    %cst_15 = arith.constant dense<0xFF800000> : vector<8x16xf32>
    %17 = vector.multi_reduction <maximumf>, %16, %cst_15 [0] : vector<2x8x16xf32> to vector<8x16xf32>
    %18 = vector.shape_cast %17 : vector<8x16xf32> to vector<1x8x16xf32>
    %19 = vector.broadcast %18 : vector<1x8x16xf32> to vector<2x8x16xf32>
    %20 = arith.subf %16, %19 : vector<2x8x16xf32>
    %21 = math.exp %20 : vector<2x8x16xf32>
    %cst_16 = arith.constant dense<0.000000e+00> : vector<8x16xf32>
    %22 = vector.multi_reduction <add>, %21, %cst_16 [0] : vector<2x8x16xf32> to vector<8x16xf32>
    %23 = vector.shape_cast %22 : vector<8x16xf32> to vector<1x8x16xf32>
    %24 = tpu.reciprocal %23 {approx = true} : vector<1x8x16xf32> -> vector<1x8x16xf32>
    %25 = vector.broadcast %24 : vector<1x8x16xf32> to vector<2x8x16xf32>
    %26 = arith.mulf %21, %25 : vector<2x8x16xf32>
    %c0_17 = arith.constant 0 : index
    %c0_18 = arith.constant 0 : index
    %c0_19 = arith.constant 0 : index
    %27 = vector.load %arg6[%c0_17, %c0_18, %c0_19] : memref<2x8x16xf32, #tpu.memory_space<vmem>>, vector<2x8x16xf32>
    tpu.vector_store %arg6[%c0_17, %c0_18, %c0_19], %26 {strides = array<i32>} : memref<2x8x16xf32, #tpu.memory_space<vmem>>, vector<2x8x16xf32>,
    return
  }
  func.func @transform_0(%arg0: i32) -> (i32, i32, i32) {
    %c0_i32 = arith.constant 0 : i32
    %c0_i32_0 = arith.constant 0 : i32
    %c0_i32_1 = arith.constant 0 : i32
    return %c0_i32, %arg0, %c0_i32_0 : i32, i32, i32
  }
  func.func @transform_1(%arg0: i32) -> (i32, i32, i32) {
    %c0_i32 = arith.constant 0 : i32
    %c0_i32_0 = arith.constant 0 : i32
    %c0_i32_1 = arith.constant 0 : i32
    return %c0_i32, %arg0, %c0_i32_0 : i32, i32, i32
  }
  func.func @transform_2(%arg0: i32) -> (i32, i32) {
    %c0_i32 = arith.constant 0 : i32
    %c0_i32_0 = arith.constant 0 : i32
    %c0_i32_1 = arith.constant 0 : i32
    return %c0_i32, %c0_i32_0 : i32, i32
  }
  func.func @transform_3(%arg0: i32) -> (i32, i32) {
    %c0_i32 = arith.constant 0 : i32
    %c0_i32_0 = arith.constant 0 : i32
    %c0_i32_1 = arith.constant 0 : i32
    return %c0_i32, %c0_i32_0 : i32, i32
  }
  func.func @transform_4(%arg0: i32) -> (i32, i32) {
    %c0_i32 = arith.constant 0 : i32
    %c0_i32_0 = arith.constant 0 : i32
    %c0_i32_1 = arith.constant 0 : i32
    return %c0_i32, %c0_i32_0 : i32, i32
  }
  func.func @transform_5(%arg0: i32) -> (i32, i32, i32) {
    %c0_i32 = arith.constant 0 : i32
    %c0_i32_0 = arith.constant 0 : i32
    %c0_i32_1 = arith.constant 0 : i32
    return %c0_i32, %arg0, %c0_i32_0 : i32, i32, i32
  }
}

</mosaic_0001>

<llo_original>
// kernel: tpu_custom_call.1
$region0: #{tpu_custom_call.1}
  #allocation0 [shape = 'u32[]', space=smem, size = 0x4, offset = 0x4, fixed_abs, tag = 'smem constant byte address 0x4 - core index']
  #allocation1 [shape = 'u32[144,128]{1,0:T(1,128)}', space=vmem, size = 0x12000, scoped, tag = 'internal scratch']
  %s0 = inlined_call_operand.vmem [shape: f32[2,8,32], index: 0, kind: input, shape index: {}]
  %s1 = inlined_call_operand.vmem [shape: f32[2,8,32], index: 1, kind: input, shape index: {}]
  %s2 = inlined_call_operand.vmem [shape: f32[32,16], index: 2, kind: input, shape index: {}]
  %s3 = inlined_call_operand.vmem [shape: f32[32,16], index: 3, kind: input, shape index: {}]
  %s4 = inlined_call_operand.vmem [shape: f32[32,16], index: 4, kind: input, shape index: {}]
  %s5 = inlined_call_operand.hbm [shape: f32[2,8,16], index: 5, kind: output, shape index: {}]
  %s6 = sld [smem:[#allocation0]]
  $region30: #{tpu_custom_call.1} parent=0
    _
  %s8 = ssub.s32 1, %s6
  %s9 = scalar_select 0, %s8, %s6
  $region1: #{tpu_custom_call.1} parent=0
    #allocation2 [shape = 'u8[8192]{0}', space=vmem, size = 0x2000, scoped, tag = 'output window, operand 0, single buffered']
    #allocation3 [shape = 's32[1]{0}', space=sflag, size = 0x4, scoped, tag = 'scoped memory for tpu_custom_call.1']
    %10 = vsyncpa [#allocation3], 0
    // Predicated region
    $region2: #{tpu_custom_call.1} parent=1 // pred_check
      _
    $region3: #{tpu_custom_call.1} parent=1 // pred_check_branch
      %12 = sbr.rel (0) target = $region5
    $region4: #{tpu_custom_call.1} parent=1 // pred_region
      _
    $region5: #{tpu_custom_call.1} parent=1 // pred_fallthru
      _
    // Predicated region
    $region6: #{tpu_custom_call.1} parent=1 // pred_check
      _
    $region7: #{tpu_custom_call.1} parent=1 // pred_check_branch
      %14 = sbr.rel (0) target = $region9
    $region8: #{tpu_custom_call.1} parent=1 // pred_region
      _
    $region9: #{tpu_custom_call.1} parent=1 // pred_fallthru
      _
    // Predicated region
    $region10: #{tpu_custom_call.1} parent=1 // pred_check
      _
    $region11: #{tpu_custom_call.1} parent=1 // pred_check_branch
      %16 = sbr.rel (0) target = $region13
    $region12: #{tpu_custom_call.1} parent=1 // pred_region
      _
    $region13: #{tpu_custom_call.1} parent=1 // pred_fallthru
      _
    // Predicated region
    $region14: #{tpu_custom_call.1} parent=1 // pred_check
      _
    $region15: #{tpu_custom_call.1} parent=1 // pred_check_branch
      %18 = sbr.rel (0) target = $region17
    $region16: #{tpu_custom_call.1} parent=1 // pred_region
      _
    $region17: #{tpu_custom_call.1} parent=1 // pred_fallthru
      _
    // Predicated region
    $region18: #{tpu_custom_call.1} parent=1 // pred_check
      _
    $region19: #{tpu_custom_call.1} parent=1 // pred_check_branch
      %20 = sbr.rel (0) target = $region21
    $region20: #{tpu_custom_call.1} parent=1 // pred_region
      _
    $region21: #{tpu_custom_call.1} parent=1 // pred_fallthru
      _
    %v21 = vld [vmem:[%s0] sm:$0xff]
    %v22 = vld [vmem:[%s0 + $0x8] sm:$0xff]
    %v23 = vld [vmem:[%s1] sm:$0xff]
    %v24 = vld [vmem:[%s1 + $0x8] sm:$0xff]
    %v25 = vld [vmem:[%s2] sm:$0xff]
    %v26 = vld [vmem:[%s2 + $0x8] sm:$0xff]
    %v27 = vld [vmem:[%s2 + $0x10] sm:$0xff]
    %v28 = vld [vmem:[%s2 + $0x18] sm:$0xff]
    %vm29 = vcmask 261120
    %v31 = vsel %vm29, %v21, 0
    %v34 = vsel %vm29, %v22, 0
    %36 = vmatprep.subr.mxu0 0.0
    %37 = vmatpush1.msra.mxu0 %v25
    %38 = vmatprep.subr.mxu0 0.0
    %39 = vmatpush1.msra.mxu0 %v26
    %40 = vmatprep.subr.mxu0 0.0
    %41 = vmatpush1.msra.mxu0 %v27
    %42 = vmatprep.subr.mxu0 0.0
    %43 = vmatpush1.msra.mxu0 %v28
    %44 = vmatprep.subr.mxu0 0.0
    %45 = vmatpush1.msra.mxu0 0.0
    %46 = vmatprep.subr.mxu0 0.0
    %47 = vmatpush1.msra.mxu0 0.0
    %48 = vmatprep.subr.mxu0 0.0
    %49 = vmatpush1.msra.mxu0 0.0
    %50 = vmatprep.subr.mxu0 0.0
    %51 = vmatpush1.msra.mxu0 0.0
    %52 = vmatprep.subr.mxu0 0.0
    %53 = vmatpush1.msra.mxu0 0.0
    %54 = vmatprep.subr.mxu0 0.0
    %55 = vmatpush1.msra.mxu0 0.0
    %56 = vmatprep.subr.mxu0 0.0
    %57 = vmatpush1.msra.mxu0 0.0
    %58 = vmatprep.subr.mxu0 0.0
    %59 = vmatpush1.msra.mxu0 0.0
    %60 = vmatprep.subr.mxu0 0.0
    %61 = vmatpush1.msra.mxu0 0.0
    %62 = vmatprep.subr.mxu0 0.0
    %63 = vmatpush1.msra.mxu0 0.0
    %64 = vmatprep.subr.mxu0 0.0
    %65 = vmatpush1.msra.mxu0 0.0
    %66 = vmatprep.subr.mxu0 0.0
    %67 = vmatpush1.msra.mxu0 0.0
    %68 = vmatprep.subr.mxu0 0.0
    %69 = vmatpush1.msra.mxu0 0.0
    %70 = vmatprep.subr.mxu0 0.0
    %71 = vmatpush1.msra.mxu0 0.0
    %72 = vmatprep.subr.mxu0 0.0
    %73 = vmatpush1.msra.mxu0 0.0
    %74 = vmatprep.subr.mxu0 0.0
    %75 = vmatpush1.msra.mxu0 0.0
    %76 = vmatprep.subr.mxu0 0.0
    %77 = vmatpush1.msra.mxu0 0.0
    %78 = vmatprep.subr.mxu0 0.0
    %79 = vmatpush1.msra.mxu0 0.0
    %80 = vmatprep.subr.mxu0 0.0
    %81 = vmatpush1.msra.mxu0 0.0
    %82 = vmatprep.subr.mxu0 0.0
    %83 = vmatpush1.msra.mxu0 0.0
    %84 = vmatprep.subr.mxu0 0.0
    %85 = vmatpush1.msra.mxu0 0.0
    %86 = vmatprep.subr.mxu0 0.0
    %87 = vmatpush1.msra.mxu0 0.0
    %88 = vmatprep.subr.mxu0 0.0
    %89 = vmatpush1.msra.mxu0 0.0
    %90 = vmatprep.subr.mxu0 0.0
    %91 = vmatpush1.msra.mxu0 0.0
    %92 = vmatprep.subr.mxu0 0.0
    %93 = vmatpush1.msra.mxu0 0.0
    %94 = vmatprep.subr.mxu0 0.0
    %95 = vmatpush1.msra.mxu0 0.0
    %96 = vmatprep.subr.mxu0 0.0
    %97 = vmatpush1.msra.mxu0 0.0
    %98 = vmatprep.subr.mxu0 0.0
    %99 = vmatpush1.msra.mxu0 0.0
    %100 = vmatprep.mubr.f32.mxu0 0.0
    %101 = vmatmul.mubr.f32.gmra.mrb[0].mxu0 %v31
    %v102 = vpop.f32.mrb[0].mxu0
    %v103 = vadd.f32 0.0, %v102
    %v104 = vpop.f32.mrb[0].mxu0
    %105 = vmatprep.mubr.f32.mxu0 0.0
    %106 = vmatmul.mubr.f32.gmra.mrb[0].mxu0 %v34
    %v107 = vpop.f32.mrb[0].mxu0
    %v108 = vadd.f32 0.0, %v107
    %v109 = vpop.f32.mrb[0].mxu0
    %110 = vdwg.mxu0
    %v111 = vld [vmem:[%s3] sm:$0xff]
    %v112 = vld [vmem:[%s3 + $0x8] sm:$0xff]
    %v113 = vld [vmem:[%s3 + $0x10] sm:$0xff]
    %v114 = vld [vmem:[%s3 + $0x18] sm:$0xff]
    %v116 = vsel %vm29, %v23, 0
    %v119 = vsel %vm29, %v24, 0
    %121 = vmatprep.subr.mxu0 0.0
    %122 = vmatpush1.msra.mxu0 %v111
    %123 = vmatprep.subr.mxu0 0.0
    %124 = vmatpush1.msra.mxu0 %v112
    %125 = vmatprep.subr.mxu0 0.0
    %126 = vmatpush1.msra.mxu0 %v113
    %127 = vmatprep.subr.mxu0 0.0
    %128 = vmatpush1.msra.mxu0 %v114
    %129 = vmatprep.subr.mxu0 0.0
    %130 = vmatpush1.msra.mxu0 0.0
    %131 = vmatprep.subr.mxu0 0.0
    %132 = vmatpush1.msra.mxu0 0.0
    %133 = vmatprep.subr.mxu0 0.0
    %134 = vmatpush1.msra.mxu0 0.0
    %135 = vmatprep.subr.mxu0 0.0
    %136 = vmatpush1.msra.mxu0 0.0
    %137 = vmatprep.subr.mxu0 0.0
    %138 = vmatpush1.msra.mxu0 0.0
    %139 = vmatprep.subr.mxu0 0.0
    %140 = vmatpush1.msra.mxu0 0.0
    %141 = vmatprep.subr.mxu0 0.0
    %142 = vmatpush1.msra.mxu0 0.0
    %143 = vmatprep.subr.mxu0 0.0
    %144 = vmatpush1.msra.mxu0 0.0
    %145 = vmatprep.subr.mxu0 0.0
    %146 = vmatpush1.msra.mxu0 0.0
    %147 = vmatprep.subr.mxu0 0.0
    %148 = vmatpush1.msra.mxu0 0.0
    %149 = vmatprep.subr.mxu0 0.0
    %150 = vmatpush1.msra.mxu0 0.0
    %151 = vmatprep.subr.mxu0 0.0
    %152 = vmatpush1.msra.mxu0 0.0
    %153 = vmatprep.subr.mxu0 0.0
    %154 = vmatpush1.msra.mxu0 0.0
    %155 = vmatprep.subr.mxu0 0.0
    %156 = vmatpush1.msra.mxu0 0.0
    %157 = vmatprep.subr.mxu0 0.0
    %158 = vmatpush1.msra.mxu0 0.0
    %159 = vmatprep.subr.mxu0 0.0
    %160 = vmatpush1.msra.mxu0 0.0
    %161 = vmatprep.subr.mxu0 0.0
    %162 = vmatpush1.msra.mxu0 0.0
    %163 = vmatprep.subr.mxu0 0.0
    %164 = vmatpush1.msra.mxu0 0.0
    %165 = vmatprep.subr.mxu0 0.0
    %166 = vmatpush1.msra.mxu0 0.0
    %167 = vmatprep.subr.mxu0 0.0
    %168 = vmatpush1.msra.mxu0 0.0
    %169 = vmatprep.subr.mxu0 0.0
    %170 = vmatpush1.msra.mxu0 0.0
    %171 = vmatprep.subr.mxu0 0.0
    %172 = vmatpush1.msra.mxu0 0.0
    %173 = vmatprep.subr.mxu0 0.0
    %174 = vmatpush1.msra.mxu0 0.0
    %175 = vmatprep.subr.mxu0 0.0
    %176 = vmatpush1.msra.mxu0 0.0
    %177 = vmatprep.subr.mxu0 0.0
    %178 = vmatpush1.msra.mxu0 0.0
    %179 = vmatprep.subr.mxu0 0.0
    %180 = vmatpush1.msra.mxu0 0.0
    %181 = vmatprep.subr.mxu0 0.0
    %182 = vmatpush1.msra.mxu0 0.0
    %183 = vmatprep.subr.mxu0 0.0
    %184 = vmatpush1.msra.mxu0 0.0
    %185 = vmatprep.mubr.f32.mxu0 0.0
    %186 = vmatmul.mubr.f32.gmra.mrb[0].mxu0 %v116
    %v187 = vpop.f32.mrb[0].mxu0
    %v188 = vadd.f32 0.0, %v187
    %v189 = vpop.f32.mrb[0].mxu0
    %190 = vmatprep.mubr.f32.mxu0 0.0
    %191 = vmatmul.mubr.f32.gmra.mrb[0].mxu0 %v119
    %v192 = vpop.f32.mrb[0].mxu0
    %v193 = vadd.f32 0.0, %v192
    %v194 = vpop.f32.mrb[0].mxu0
    %195 = vdwg.mxu0
    %v196 = vld [vmem:[%s4] sm:$0xff]
    %v197 = vld [vmem:[%s4 + $0x8] sm:$0xff]
    %v198 = vld [vmem:[%s4 + $0x10] sm:$0xff]
    %v199 = vld [vmem:[%s4 + $0x18] sm:$0xff]
    %200 = vmatprep.subr.mxu0 0.0
    %201 = vmatpush1.msra.mxu0 %v196
    %202 = vmatprep.subr.mxu0 0.0
    %203 = vmatpush1.msra.mxu0 %v197
    %204 = vmatprep.subr.mxu0 0.0
    %205 = vmatpush1.msra.mxu0 %v198
    %206 = vmatprep.subr.mxu0 0.0
    %207 = vmatpush1.msra.mxu0 %v199
    %208 = vmatprep.subr.mxu0 0.0
    %209 = vmatpush1.msra.mxu0 0.0
    %210 = vmatprep.subr.mxu0 0.0
    %211 = vmatpush1.msra.mxu0 0.0
    %212 = vmatprep.subr.mxu0 0.0
    %213 = vmatpush1.msra.mxu0 0.0
    %214 = vmatprep.subr.mxu0 0.0
    %215 = vmatpush1.msra.mxu0 0.0
    %216 = vmatprep.subr.mxu0 0.0
    %217 = vmatpush1.msra.mxu0 0.0
    %218 = vmatprep.subr.mxu0 0.0
    %219 = vmatpush1.msra.mxu0 0.0
    %220 = vmatprep.subr.mxu0 0.0
    %221 = vmatpush1.msra.mxu0 0.0
    %222 = vmatprep.subr.mxu0 0.0
    %223 = vmatpush1.msra.mxu0 0.0
    %224 = vmatprep.subr.mxu0 0.0
    %225 = vmatpush1.msra.mxu0 0.0
    %226 = vmatprep.subr.mxu0 0.0
    %227 = vmatpush1.msra.mxu0 0.0
    %228 = vmatprep.subr.mxu0 0.0
    %229 = vmatpush1.msra.mxu0 0.0
    %230 = vmatprep.subr.mxu0 0.0
    %231 = vmatpush1.msra.mxu0 0.0
    %232 = vmatprep.subr.mxu0 0.0
    %233 = vmatpush1.msra.mxu0 0.0
    %234 = vmatprep.subr.mxu0 0.0
    %235 = vmatpush1.msra.mxu0 0.0
    %236 = vmatprep.subr.mxu0 0.0
    %237 = vmatpush1.msra.mxu0 0.0
    %238 = vmatprep.subr.mxu0 0.0
    %239 = vmatpush1.msra.mxu0 0.0
    %240 = vmatprep.subr.mxu0 0.0
    %241 = vmatpush1.msra.mxu0 0.0
    %242 = vmatprep.subr.mxu0 0.0
    %243 = vmatpush1.msra.mxu0 0.0
    %244 = vmatprep.subr.mxu0 0.0
    %245 = vmatpush1.msra.mxu0 0.0
    %246 = vmatprep.subr.mxu0 0.0
    %247 = vmatpush1.msra.mxu0 0.0
    %248 = vmatprep.subr.mxu0 0.0
    %249 = vmatpush1.msra.mxu0 0.0
    %250 = vmatprep.subr.mxu0 0.0
    %251 = vmatpush1.msra.mxu0 0.0
    %252 = vmatprep.subr.mxu0 0.0
    %253 = vmatpush1.msra.mxu0 0.0
    %254 = vmatprep.subr.mxu0 0.0
    %255 = vmatpush1.msra.mxu0 0.0
    %256 = vmatprep.subr.mxu0 0.0
    %257 = vmatpush1.msra.mxu0 0.0
    %258 = vmatprep.subr.mxu0 0.0
    %259 = vmatpush1.msra.mxu0 0.0
    %260 = vmatprep.subr.mxu0 0.0
    %261 = vmatpush1.msra.mxu0 0.0
    %262 = vmatprep.subr.mxu0 0.0
    %263 = vmatpush1.msra.mxu0 0.0
    %264 = vmatprep.mubr.f32.mxu0 0.0
    %265 = vmatmul.mubr.f32.gmra.mrb[0].mxu0 %v31
    %v266 = vpop.f32.mrb[0].mxu0
    %v267 = vadd.f32 0.0, %v266
    %v268 = vpop.f32.mrb[0].mxu0
    %269 = vmatprep.mubr.f32.mxu0 0.0
    %270 = vmatmul.mubr.f32.gmra.mrb[0].mxu0 %v34
    %v271 = vpop.f32.mrb[0].mxu0
    %v272 = vadd.f32 0.0, %v271
    %v273 = vpop.f32.mrb[0].mxu0
    %274 = vdwg.mxu0
    %v275 = vmul.f32 %v103, %v188
    %v276 = vmul.f32 %v108, %v193
    %v277 = vmul.f32 %v275, %v267
    %v278 = vmul.f32 %v276, %v272
    %v279 = vmul.f32 %v277, 0.25
    %v280 = vmul.f32 %v278, 0.25
    %v281 = vmax.f32 %v279, 0.0
    %v282 = vmax.f32 %v280, 0.0
    %vm283 = vcmask 130048
    %v284 = vsel %vm283, %v281, -inf
    %v285 = vsel %vm283, %v282, -inf
    %v286 = vmax.f32 %v284, %v285
    %v287 = vsub.f32 %v281, %v286
    %v288 = vsub.f32 %v282, %v286
    %v289 = vmul.f32 %v287, 1.442695
    %v290 = vpow.pop %v289
    %v291 = vmul.f32 %v288, 1.442695
    %v292 = vpow.pop %v291
    %v293 = vsel %vm283, %v290, 0.0
    %v294 = vsel %vm283, %v292, 0.0
    %v295 = vadd.f32 %v293, %v294
    %v296 = vrcp.pop %v295
    %v297 = vmul.f32 %v290, %v296
    %v298 = vmul.f32 %v292, %v296
    %299 = vst.msk [vmem:[#allocation2] sm:$0xff] %vm283, %v297
    %300 = vst.msk [vmem:[#allocation2 + $0x8] sm:$0xff] %vm283, %v298
    // Predicated region
    $region22: #{tpu_custom_call.1} parent=1 // pred_check
      _
    $region23: #{tpu_custom_call.1} parent=1 // pred_check_branch
      %302 = sbr.rel (0) target = $region25
    $region24: #{tpu_custom_call.1} parent=1 // pred_region
      %s304 = ssub.s32 256, 256
      %305 = vsyncadd [#allocation3], %s304
      %s306 = sshll.u32 [#allocation2], 4
      %s307 = int_to_ptr.vmem [resolvable:$true] %s306
      %312 = dma.vmem_to_hbm [thread:$0]  %s307, 256, %s5, [#allocation3], 128, 128, 8
    $region25: #{tpu_custom_call.1} parent=1 // pred_fallthru
      _
    // Predicated region
    $region26: #{tpu_custom_call.1} parent=1 // pred_check
      _
    $region27: #{tpu_custom_call.1} parent=1 // pred_check_branch
      %314 = sbr.rel (0) target = $region29
    $region28: #{tpu_custom_call.1} parent=1 // pred_region
      %315 = dma.done [#allocation3], 256
    $region29: #{tpu_custom_call.1} parent=1 // pred_fallthru
      _
    %316 = vsyncpa [#allocation3], 1

</llo_original>
